<compile_context>
chip_gen: v7x
topology: tpu7x:2x2x1
jax: 0.10.0
libtpu: 0.0.40
codegen_flags: <defaults>
</compile_context>

<pallas_src>
import functools

import jax
import jax.numpy as jnp
from jax.experimental import pallas as pl
from jax.experimental.pallas import tpu as pltpu

LANE = 128        # lane-dense padding width
NEG_BIG = -1e30   # additive mask value for invalid conv output positions


def _leaky_relu(x, slope=0.01):
    # torch.nn.LeakyReLU() default negative_slope = 0.01
    return jnp.where(x >= 0, x, slope * x)


def textcnn_kernel(max_w, x_ref, w_all_ref, b_all_ref, mask_ref,
                   lin1_w_ref, lin1_b_ref, lin2_w_ref, lin2_b_ref, out_ref):
    """One batch tile of the full TextCNN forward (post-embedding).

    x_ref      : (Bt, S, E)         embedded words for this batch tile
    w_all_ref  : (E, max_w*LANE)    fused conv weights, tap-major 128-lane blocks
    b_all_ref  : (1, LANE)          fused conv bias (group-major, zero padded)
    mask_ref   : (S, LANE)          0 where t is a valid conv output, -1e30 else
    lin1_*     : (LANE, LANE), (1, LANE)  zero-padded linear1
    lin2_*     : (LANE, LANE), (1, LANE)  zero-padded linear2
    out_ref    : (Bt, LANE)         padded logits (first C lanes are real)
    """
    Bt, S, E = x_ref.shape
    n_rows = Bt * S

    # --- conv: ONE fused MXU matmul over all groups and taps ---------------
    xf = x_ref[...].reshape(n_rows, E)          # S % 8 == 0 -> layout-friendly
    y = jnp.dot(xf, w_all_ref[...], preferred_element_type=jnp.float32)

    # Tap-shifted sum: 128-lane block k holds x[t] . W[:, tap k]; rolling the
    # block up by k aligns it with output position t.  Wrapped-around rows are
    # masked out below, so the circular roll never affects valid outputs.
    acc = y[:, :LANE]
    for k in range(1, max_w):                   # static unroll (max_w - 1 rolls)
        acc = acc + pltpu.roll(y[:, k * LANE:(k + 1) * LANE],
                               shift=n_rows - k, axis=0)

    # --- masked max over time, conv bias, linear1/2 + LeakyReLU ------------
    conv = acc.reshape(Bt, S, LANE) + mask_ref[...][None, :, :]
    pooled = jnp.max(conv, axis=1) + b_all_ref[...]          # (Bt, LANE)

    h = jnp.dot(pooled, lin1_w_ref[...],
                preferred_element_type=jnp.float32) + lin1_b_ref[...]
    h = _leaky_relu(h)
    o = jnp.dot(h, lin2_w_ref[...],
                preferred_element_type=jnp.float32) + lin2_b_ref[...]
    out_ref[...] = _leaky_relu(o)


def textcnn_forward(x_emb, conv_ws, conv_bs, lin1_w, lin1_b, lin2_w, lin2_b,
                    window_sizes, filter_num, *, batch_tile=8):
    B, S, E = x_emb.shape
    G = len(window_sizes)
    F = filter_num
    GF = G * F
    max_w = max(window_sizes)
    H1 = lin1_w.shape[1]
    C = lin2_w.shape[1]
    assert GF <= LANE and H1 <= LANE and C <= LANE

    if B % batch_tile != 0:
        batch_tile = B                       # tiny / ragged batch fallback
    x_emb = x_emb.astype(jnp.float32)

    # ----- wrapper-side layout plumbing (zero in-kernel cost) --------------
    # Fused conv weights: (E, max_w*LANE).  Block k, lane g*F+f = W_g[k,:,f]
    # when k < w_g, else 0.
    w_all = jnp.zeros((max_w, E, LANE), jnp.float32)
    for g, (w, W) in enumerate(zip(window_sizes, conv_ws)):
        w_all = w_all.at[:w, :, g * F:(g + 1) * F].set(W.astype(jnp.float32))
    w_all = w_all.transpose(1, 0, 2).reshape(E, max_w * LANE)

    # Fused conv bias (added after the max — bias is constant over time).
    b_all = jnp.zeros((1, LANE), jnp.float32)
    for g, b in enumerate(conv_bs):
        b_all = b_all.at[0, g * F:(g + 1) * F].set(b.astype(jnp.float32))

    # Additive time-validity mask: lane l belongs to group l // F; valid conv
    # output positions are t <= S - w_g.  Padding lanes stay "valid" (their
    # conv values are exactly 0), so they pool to 0 and feed zero lin1 rows.
    limit = jnp.full((LANE,), S - 1, jnp.int32)
    for g, w in enumerate(window_sizes):
        limit = limit.at[g * F:(g + 1) * F].set(S - w)
    t_idx = jnp.arange(S, dtype=jnp.int32)[:, None]
    neg_mask = jnp.where(t_idx <= limit[None, :], 0.0, NEG_BIG).astype(jnp.float32)

    # Lane-dense, zero-padded linear layers.
    lin1_wp = jnp.zeros((LANE, LANE), jnp.float32).at[:GF, :H1].set(lin1_w)
    lin1_bp = jnp.zeros((1, LANE), jnp.float32).at[0, :H1].set(lin1_b)
    lin2_wp = jnp.zeros((LANE, LANE), jnp.float32).at[:H1, :C].set(lin2_w)
    lin2_bp = jnp.zeros((1, LANE), jnp.float32).at[0, :C].set(lin2_b)

    grid = (B // batch_tile,)
    flops = 2 * B * S * E * max_w * LANE + 2 * 2 * B * LANE * LANE
    bytes_accessed = 4 * (B * S * E + E * max_w * LANE + S * LANE
                          + 3 * LANE + 2 * LANE * LANE + B * LANE)

    kern = functools.partial(textcnn_kernel, max_w)
    out_padded = pl.pallas_call(
        kern,
        out_shape=jax.ShapeDtypeStruct((B, LANE), jnp.float32),
        grid=grid,
        in_specs=[
            pl.BlockSpec((batch_tile, S, E), lambda i: (i, 0, 0)),
            pl.BlockSpec(w_all.shape, lambda i: (0, 0)),
            pl.BlockSpec(b_all.shape, lambda i: (0, 0)),
            pl.BlockSpec(neg_mask.shape, lambda i: (0, 0)),
            pl.BlockSpec(lin1_wp.shape, lambda i: (0, 0)),
            pl.BlockSpec(lin1_bp.shape, lambda i: (0, 0)),
            pl.BlockSpec(lin2_wp.shape, lambda i: (0, 0)),
            pl.BlockSpec(lin2_bp.shape, lambda i: (0, 0)),
        ],
        out_specs=pl.BlockSpec((batch_tile, LANE), lambda i: (i, 0)),
        compiler_params=pltpu.CompilerParams(
            dimension_semantics=("parallel",)),
        cost_estimate=pl.CostEstimate(
            flops=flops, transcendentals=0, bytes_accessed=bytes_accessed),
    )(x_emb, w_all, b_all, neg_mask, lin1_wp, lin1_bp, lin2_wp, lin2_bp)

    return out_padded[:, :C]


def reference_forward(x_emb, conv_ws, conv_bs, lin1_w, lin1_b, lin2_w, lin2_b,
                      window_sizes):
    """Pure-JAX reference matching the PyTorch forward semantics."""
    B, S, E = x_emb.shape
    pooled = []
    for W, b, w in zip(conv_ws, conv_bs, window_sizes):
        t_out = S - w + 1
        conv = b[None, None, :]
        for k in range(w):
            conv = conv + jnp.einsum('bte,ef->btf', x_emb[:, k:k + t_out, :], W[k])
        pooled.append(jnp.max(conv, axis=1))                  # (B, F)
    feat = jnp.concatenate(pooled, axis=-1)                   # (B, G*F)
    h = _leaky_relu(feat @ lin1_w + lin1_b)
    o = _leaky_relu(h @ lin2_w + lin2_b)
    return o


if __name__ == "__main__":
    # Small, forward-consistent shapes (batch is a multiple of the 8-row tile
    # so the batch grid axis actually pipelines / parallelizes).
    batch = 16
    seq_len = 16
    emb_dim = 32
    vocab = 20
    filter_window_sizes = [2, 3, 4]
    filter_num = 2                      # fixed to 2 in the module
    feat_num = 4
    hidden = 50                         # linear1 output size

    key = jax.random.PRNGKey(0)
    keys = jax.random.split(key, 2 + 2 * len(filter_window_sizes) + 3)

    emb_table = jax.random.normal(keys[0], (vocab, emb_dim), jnp.float32) * 0.1
    words = jax.random.randint(keys[1], (batch, seq_len), 0, vocab)

    conv_ws, conv_bs = [], []
    for g, w in enumerate(filter_window_sizes):
        # conv weight stored as (window, emb_dim, filter_num)
        # (== torch Conv1d weight (filter_num, emb_dim, window) transposed)
        conv_ws.append(jax.random.normal(keys[2 + 2 * g],
                                         (w, emb_dim, filter_num),
                                         jnp.float32) * 0.1)
        conv_bs.append(jax.random.normal(keys[3 + 2 * g],
                                         (filter_num,), jnp.float32) * 0.1)

    k_off = 2 + 2 * len(filter_window_sizes)
    lin1_w = jax.random.normal(keys[k_off],
                               (filter_num * len(filter_window_sizes), hidden),
                               jnp.float32) * 0.1
    lin1_b = jax.random.normal(keys[k_off + 1], (hidden,), jnp.float32) * 0.1
    lin2_w = jax.random.normal(keys[k_off + 2], (hidden, feat_num),
                               jnp.float32) * 0.1
    lin2_b = jnp.zeros((feat_num,), jnp.float32)

    # Glue: embedding lookup (LayerWordEmbeddings) done in plain JAX.
    x_emb = jnp.take(emb_table, words, axis=0)      # (B, S, E)

    out = textcnn_forward(x_emb, conv_ws, conv_bs, lin1_w, lin1_b,
                          lin2_w, lin2_b, filter_window_sizes, filter_num)
    out = jax.block_until_ready(out)

    ref = reference_forward(x_emb, conv_ws, conv_bs, lin1_w, lin1_b,
                            lin2_w, lin2_b, filter_window_sizes)
    assert out.shape == (batch, feat_num)
    assert jnp.allclose(out, ref, atol=1e-5, rtol=1e-5), (out, ref)

    print("KERNEL_OK")
</pallas_src>

<mosaic_0001>
module attributes {stable_mosaic.version = 11 : i64} {
  func.func @textcnn_kernel(%arg0: i32, %arg1: memref<8x16x32xf32, #tpu.memory_space<vmem>>, %arg2: memref<32x512xf32, #tpu.memory_space<vmem>>, %arg3: memref<1x128xf32, #tpu.memory_space<vmem>>, %arg4: memref<16x128xf32, #tpu.memory_space<vmem>>, %arg5: memref<128x128xf32, #tpu.memory_space<vmem>>, %arg6: memref<1x128xf32, #tpu.memory_space<vmem>>, %arg7: memref<128x128xf32, #tpu.memory_space<vmem>>, %arg8: memref<1x128xf32, #tpu.memory_space<vmem>>, %arg9: memref<8x128xf32, #tpu.memory_space<vmem>>) attributes {dimension_semantics = [#tpu.dimension_semantics<parallel>], iteration_bounds = array<i64: 2>, scalar_prefetch = 0 : i64, scratch_operands = 0 : i64, tpu.core_type = #tpu.core_type<tc>, window_params = [{transform_indices = @transform_0, window_bounds = array<i64: 8, 16, 32>}, {pipeline_mode = #tpu.pipeline_mode<synchronous>, transform_indices = @transform_1, window_bounds = array<i64: 32, 512>}, {pipeline_mode = #tpu.pipeline_mode<synchronous>, transform_indices = @transform_2, window_bounds = array<i64: 1, 128>}, {pipeline_mode = #tpu.pipeline_mode<synchronous>, transform_indices = @transform_3, window_bounds = array<i64: 16, 128>}, {pipeline_mode = #tpu.pipeline_mode<synchronous>, transform_indices = @transform_4, window_bounds = array<i64: 128, 128>}, {pipeline_mode = #tpu.pipeline_mode<synchronous>, transform_indices = @transform_5, window_bounds = array<i64: 1, 128>}, {pipeline_mode = #tpu.pipeline_mode<synchronous>, transform_indices = @transform_6, window_bounds = array<i64: 128, 128>}, {pipeline_mode = #tpu.pipeline_mode<synchronous>, transform_indices = @transform_7, window_bounds = array<i64: 1, 128>}, {transform_indices = @transform_8, window_bounds = array<i64: 8, 128>}]} {
    %c0 = arith.constant 0 : index
    %c0_0 = arith.constant 0 : index
    %c0_1 = arith.constant 0 : index
    %0 = vector.load %arg1[%c0, %c0_0, %c0_1] : memref<8x16x32xf32, #tpu.memory_space<vmem>>, vector<8x16x32xf32>
    %1 = vector.shape_cast %0 : vector<8x16x32xf32> to vector<128x32xf32>
    %c0_2 = arith.constant 0 : index
    %c0_3 = arith.constant 0 : index
    %2 = vector.load %arg2[%c0_2, %c0_3] : memref<32x512xf32, #tpu.memory_space<vmem>>, vector<32x512xf32>
    %cst = arith.constant dense<0.000000e+00> : vector<128x512xf32>
    %3 = tpu.matmul %1, %2, %cst {dimension_numbers = #tpu.dot_dimension_numbers<[1], [0], [0], [1], [0, 0, 1, 1], [], []>} : vector<128x32xf32>, vector<32x512xf32>, vector<128x512xf32> -> vector<128x512xf32>
    %4 = vector.extract_strided_slice %3 {offsets = [0, 0], sizes = [128, 128], strides = [1, 1]} : vector<128x512xf32> to vector<128x128xf32>
    %5 = vector.extract_strided_slice %3 {offsets = [0, 128], sizes = [128, 128], strides = [1, 1]} : vector<128x512xf32> to vector<128x128xf32>
    %c127_i32 = arith.constant 127 : i32
    %6 = tpu.dynamic_rotate %5 by %c127_i32 dim 0 : vector<128x128xf32>, i32 -> vector<128x128xf32>
    %7 = arith.addf %4, %6 : vector<128x128xf32>
    %8 = vector.extract_strided_slice %3 {offsets = [0, 256], sizes = [128, 128], strides = [1, 1]} : vector<128x512xf32> to vector<128x128xf32>
    %c126_i32 = arith.constant 126 : i32
    %9 = tpu.dynamic_rotate %8 by %c126_i32 dim 0 : vector<128x128xf32>, i32 -> vector<128x128xf32>
    %10 = arith.addf %7, %9 : vector<128x128xf32>
    %11 = vector.extract_strided_slice %3 {offsets = [0, 384], sizes = [128, 128], strides = [1, 1]} : vector<128x512xf32> to vector<128x128xf32>
    %c125_i32 = arith.constant 125 : i32
    %12 = tpu.dynamic_rotate %11 by %c125_i32 dim 0 : vector<128x128xf32>, i32 -> vector<128x128xf32>
    %13 = arith.addf %10, %12 : vector<128x128xf32>
    %14 = vector.shape_cast %13 : vector<128x128xf32> to vector<8x16x128xf32>
    %c0_4 = arith.constant 0 : index
    %c0_5 = arith.constant 0 : index
    %15 = vector.load %arg4[%c0_4, %c0_5] : memref<16x128xf32, #tpu.memory_space<vmem>>, vector<16x128xf32>
    %16 = vector.shape_cast %15 : vector<16x128xf32> to vector<1x16x128xf32>
    %17 = vector.broadcast %16 : vector<1x16x128xf32> to vector<8x16x128xf32>
    %18 = arith.addf %14, %17 : vector<8x16x128xf32>
    %cst_6 = arith.constant dense<0xFF800000> : vector<8x128xf32>
    %19 = vector.multi_reduction <maximumf>, %18, %cst_6 [1] : vector<8x16x128xf32> to vector<8x128xf32>
    %c0_7 = arith.constant 0 : index
    %c0_8 = arith.constant 0 : index
    %20 = vector.load %arg3[%c0_7, %c0_8] : memref<1x128xf32, #tpu.memory_space<vmem>>, vector<1x128xf32>
    %21 = vector.broadcast %20 : vector<1x128xf32> to vector<8x128xf32>
    %22 = arith.addf %19, %21 : vector<8x128xf32>
    %c0_9 = arith.constant 0 : index
    %c0_10 = arith.constant 0 : index
    %23 = vector.load %arg5[%c0_9, %c0_10] : memref<128x128xf32, #tpu.memory_space<vmem>>, vector<128x128xf32>
    %cst_11 = arith.constant dense<0.000000e+00> : vector<8x128xf32>
    %24 = tpu.matmul %22, %23, %cst_11 {dimension_numbers = #tpu.dot_dimension_numbers<[1], [0], [0], [1], [0, 0, 1, 1], [], []>} : vector<8x128xf32>, vector<128x128xf32>, vector<8x128xf32> -> vector<8x128xf32>
    %c0_12 = arith.constant 0 : index
    %c0_13 = arith.constant 0 : index
    %25 = vector.load %arg6[%c0_12, %c0_13] : memref<1x128xf32, #tpu.memory_space<vmem>>, vector<1x128xf32>
    %26 = vector.broadcast %25 : vector<1x128xf32> to vector<8x128xf32>
    %27 = arith.addf %24, %26 : vector<8x128xf32>
    %cst_14 = arith.constant 0.000000e+00 : f32
    %28 = vector.broadcast %cst_14 : f32 to vector<8x128xf32>
    %29 = arith.cmpf oge, %27, %28 : vector<8x128xf32>
    %cst_15 = arith.constant 0.00999999977 : f32
    %30 = vector.broadcast %cst_15 : f32 to vector<8x128xf32>
    %31 = arith.mulf %30, %27 : vector<8x128xf32>
    %32 = arith.select %29, %27, %31 : vector<8x128xi1>, vector<8x128xf32>
    %c0_16 = arith.constant 0 : index
    %c0_17 = arith.constant 0 : index
    %33 = vector.load %arg7[%c0_16, %c0_17] : memref<128x128xf32, #tpu.memory_space<vmem>>, vector<128x128xf32>
    %cst_18 = arith.constant dense<0.000000e+00> : vector<8x128xf32>
    %34 = tpu.matmul %32, %33, %cst_18 {dimension_numbers = #tpu.dot_dimension_numbers<[1], [0], [0], [1], [0, 0, 1, 1], [], []>} : vector<8x128xf32>, vector<128x128xf32>, vector<8x128xf32> -> vector<8x128xf32>
    %c0_19 = arith.constant 0 : index
    %c0_20 = arith.constant 0 : index
    %35 = vector.load %arg8[%c0_19, %c0_20] : memref<1x128xf32, #tpu.memory_space<vmem>>, vector<1x128xf32>
    %36 = vector.broadcast %35 : vector<1x128xf32> to vector<8x128xf32>
    %37 = arith.addf %34, %36 : vector<8x128xf32>
    %cst_21 = arith.constant 0.000000e+00 : f32
    %38 = vector.broadcast %cst_21 : f32 to vector<8x128xf32>
    %39 = arith.cmpf oge, %37, %38 : vector<8x128xf32>
    %cst_22 = arith.constant 0.00999999977 : f32
    %40 = vector.broadcast %cst_22 : f32 to vector<8x128xf32>
    %41 = arith.mulf %40, %37 : vector<8x128xf32>
    %42 = arith.select %39, %37, %41 : vector<8x128xi1>, vector<8x128xf32>
    %c0_23 = arith.constant 0 : index
    %c0_24 = arith.constant 0 : index
    %43 = vector.load %arg9[%c0_23, %c0_24] : memref<8x128xf32, #tpu.memory_space<vmem>>, vector<8x128xf32>
    tpu.vector_store %arg9[%c0_23, %c0_24], %42 {strides = array<i32>} : memref<8x128xf32, #tpu.memory_space<vmem>>, vector<8x128xf32>,
    return
  }
  func.func @transform_0(%arg0: i32) -> (i32, i32, i32) {
    %c0_i32 = arith.constant 0 : i32
    %c0_i32_0 = arith.constant 0 : i32
    %c0_i32_1 = arith.constant 0 : i32
    return %arg0, %c0_i32, %c0_i32_0 : i32, i32, i32
  }
  func.func @transform_1(%arg0: i32) -> (i32, i32) {
    %c0_i32 = arith.constant 0 : i32
    %c0_i32_0 = arith.constant 0 : i32
    %c0_i32_1 = arith.constant 0 : i32
    return %c0_i32, %c0_i32_0 : i32, i32
  }
  func.func @transform_2(%arg0: i32) -> (i32, i32) {
    %c0_i32 = arith.constant 0 : i32
    %c0_i32_0 = arith.constant 0 : i32
    %c0_i32_1 = arith.constant 0 : i32
    return %c0_i32, %c0_i32_0 : i32, i32
  }
  func.func @transform_3(%arg0: i32) -> (i32, i32) {
    %c0_i32 = arith.constant 0 : i32
    %c0_i32_0 = arith.constant 0 : i32
    %c0_i32_1 = arith.constant 0 : i32
    return %c0_i32, %c0_i32_0 : i32, i32
  }
  func.func @transform_4(%arg0: i32) -> (i32, i32) {
    %c0_i32 = arith.constant 0 : i32
    %c0_i32_0 = arith.constant 0 : i32
    %c0_i32_1 = arith.constant 0 : i32
    return %c0_i32, %c0_i32_0 : i32, i32
  }
  func.func @transform_5(%arg0: i32) -> (i32, i32) {
    %c0_i32 = arith.constant 0 : i32
    %c0_i32_0 = arith.constant 0 : i32
    %c0_i32_1 = arith.constant 0 : i32
    return %c0_i32, %c0_i32_0 : i32, i32
  }
  func.func @transform_6(%arg0: i32) -> (i32, i32) {
    %c0_i32 = arith.constant 0 : i32
    %c0_i32_0 = arith.constant 0 : i32
    %c0_i32_1 = arith.constant 0 : i32
    return %c0_i32, %c0_i32_0 : i32, i32
  }
  func.func @transform_7(%arg0: i32) -> (i32, i32) {
    %c0_i32 = arith.constant 0 : i32
    %c0_i32_0 = arith.constant 0 : i32
    %c0_i32_1 = arith.constant 0 : i32
    return %c0_i32, %c0_i32_0 : i32, i32
  }
  func.func @transform_8(%arg0: i32) -> (i32, i32) {
    %c0_i32 = arith.constant 0 : i32
    %c0_i32_0 = arith.constant 0 : i32
    return %arg0, %c0_i32 : i32, i32
  }
}

</mosaic_0001>

<llo_original>
// kernel: tpu_custom_call.1
$region0: #{tpu_custom_call.1}
  #allocation0 [shape = 'u32[]', space=smem, size = 0x4, offset = 0x4, fixed_abs, tag = 'smem constant byte address 0x4 - core index']
  #allocation1 [shape = 'u32[144,128]{1,0:T(1,128)}', space=vmem, size = 0x12000, scoped, tag = 'internal scratch']
  %s0 = inlined_call_operand.hbm [shape: f32[16,16,32], index: 0, kind: input, shape index: {}]
  %s1 = inlined_call_operand.hbm [shape: f32[32,512], index: 1, kind: input, shape index: {}]
  %s2 = inlined_call_operand.vmem [shape: f32[1,128], index: 2, kind: input, shape index: {}]
  %s3 = inlined_call_operand.hbm [shape: f32[16,128], index: 3, kind: input, shape index: {}]
  %s4 = inlined_call_operand.hbm [shape: f32[128,128], index: 4, kind: input, shape index: {}]
  %s5 = inlined_call_operand.vmem [shape: f32[1,128], index: 5, kind: input, shape index: {}]
  %s6 = inlined_call_operand.hbm [shape: f32[128,128], index: 6, kind: input, shape index: {}]
  %s7 = inlined_call_operand.vmem [shape: f32[1,128], index: 7, kind: input, shape index: {}]
  %s8 = inlined_call_operand.hbm [shape: f32[16,128], index: 8, kind: output, shape index: {}]
  %s9 = sld [smem:[#allocation0]]
  $region85: #{tpu_custom_call.1} parent=0
    _
  %s11 = ssub.s32 1, %s9
  %s12 = scalar_select 0, %s11, %s9
  $region1: #{tpu_custom_call.1} parent=0
    #allocation2 [shape = 'u8[131072]{0}', space=vmem, size = 0x20000, scoped, tag = 'input window, operand 0']
    #allocation3 [shape = 's32[2]{0}', space=sflag, size = 0x8, scoped, tag = 'scoped memory for tpu_custom_call.1']
    #allocation4 [shape = 's32[2]{0}', space=sflag, size = 0x8, scoped, tag = 'scoped memory for tpu_custom_call.1']
    #allocation5 [shape = 'u8[65536]{0}', space=vmem, size = 0x10000, scoped, tag = 'input window, operand 1, single buffered']
    #allocation6 [shape = 's32[1]{0}', space=sflag, size = 0x4, scoped, tag = 'scoped memory for tpu_custom_call.1']
    #allocation7 [shape = 'u8[8192]{0}', space=vmem, size = 0x2000, scoped, tag = 'input window, operand 3, single buffered']
    #allocation8 [shape = 'u8[65536]{0}', space=vmem, size = 0x10000, scoped, tag = 'input window, operand 4, single buffered']
    #allocation9 [shape = 's32[1]{0}', space=sflag, size = 0x4, scoped, tag = 'scoped memory for tpu_custom_call.1']
    #allocation10 [shape = 'u8[65536]{0}', space=vmem, size = 0x10000, scoped, tag = 'input window, operand 6, single buffered']
    #allocation11 [shape = 'u8[8192]{0}', space=vmem, size = 0x2000, scoped, tag = 'output window, operand 0']
    %13 = vsyncpa [#allocation3], 0
    %s14 = scalar_lea.sflag [#allocation3], 1
    %15 = vsyncpa %s14, 0
    %16 = vsyncpa [#allocation6], 0
    %17 = vsyncpa [#allocation9], 0
    %18 = vsyncpa [#allocation4], 0
    %s19 = scalar_lea.sflag [#allocation4], 1
    %20 = vsyncpa %s19, 0
    loop: start=0, step=1, limit=4
    $region2: #{tpu_custom_call.1} parent=1 // loop_pre_header
      _
    $region3: #{tpu_custom_call.1} parent=1 // loop_header
      %s22 = sphi 0, %s26
      %p23 = scmp.ge.s32.totalorder %s22, 4
      %s32 = sphi 0, %s34
      %s35 = sphi 0, %s32
      %s36 = sphi 0, %s35
      %s52 = sphi 0, %s36
      %s56 = sphi 0, %s56
      %s58 = sphi 0, %s56
      %s59 = sphi 0, %s58
      %s73 = sphi 0, %s59
      %s77 = sphi 0, %s77
      %s79 = sphi 0, %s77
      %s80 = sphi 0, %s79
      %s94 = sphi 0, %s80
      %s98 = sphi 0, %s98
      %s100 = sphi 0, %s98
      %s101 = sphi 0, %s100
      %s115 = sphi 0, %s101
      %s119 = sphi 0, %s119
      %s121 = sphi 0, %s119
      %s122 = sphi 0, %s121
      %s136 = sphi 0, %s122
      %s140 = sphi 0, %s140
      %s142 = sphi 0, %s140
      %s143 = sphi 0, %s142
      %s157 = sphi 0, %s143
      %s161 = sphi 0, %s161
      %s163 = sphi 0, %s161
      %s164 = sphi 0, %s163
      %s178 = sphi 0, %s164
      %s182 = sphi 0, %s182
      %s184 = sphi 0, %s182
      %s185 = sphi 0, %s184
      %s199 = sphi 0, %s185
      %s205 = sphi 0, %s207
      %s208 = sphi 0, %s205
      %s209 = sphi 0, %s208
      %s225 = sphi 0, %s209
    $region4: #{tpu_custom_call.1} parent=1 // loop_header_branch
      %25 = sbr.rel (%p23) target = $region8
    $region5: #{tpu_custom_call.1} parent=1 // loop_body
      %s27 = ssub.s32 %s22, 1
      %s28 = ssub.s32 %s22, 2
      %s29 = sadd.s32 %s22, 1
      %s30 = ssub.s32 %s22, %s29
      %p31 = scmp.eq.s32.totalorder %s30, 0
      %s33 = sadd.s32 %s32, 1
      %s34 = scalar_select %p31, %s32, %s33
      %p37 = pneg %p31
      %p38 = scmp.eq.s32.totalorder %s22, 1
      %p39 = por %p37, %p38
      %p40 = scmp.ne.s32.totalorder %s32, %s35
      %p41 = scmp.eq.s32.totalorder %s22, 0
      %p42 = por %p40, %p41
      %p43 = scmp.ne.s32.totalorder %s32, %s35
      %p44 = scmp.eq.s32.totalorder %s27, 1
      %p45 = por %p43, %p44
      %p46 = scmp.ne.s32.totalorder %s35, %s36
      %p47 = scmp.eq.s32.totalorder %s27, 0
      %p48 = por %p46, %p47
      %p49 = scmp.ne.s32.totalorder %s35, %s36
      %p50 = scmp.eq.s32.totalorder %s28, 1
      %p51 = por %p49, %p50
      %p53 = scmp.ne.s32.totalorder %s36, %s52
      %p54 = scmp.eq.s32.totalorder %s28, 0
      %p55 = por %p53, %p54
      %s57 = sadd.s32 %s56, 1
      %p60 = scmp.eq.s32.totalorder %s22, 1
      %p61 = scmp.ne.s32.totalorder %s56, %s58
      %p62 = scmp.eq.s32.totalorder %s22, 0
      %p63 = por %p61, %p62
      %p64 = scmp.ne.s32.totalorder %s56, %s58
      %p65 = scmp.eq.s32.totalorder %s27, 1
      %p66 = por %p64, %p65
      %p67 = scmp.ne.s32.totalorder %s58, %s59
      %p68 = scmp.eq.s32.totalorder %s27, 0
      %p69 = por %p67, %p68
      %p70 = scmp.ne.s32.totalorder %s58, %s59
      %p71 = scmp.eq.s32.totalorder %s28, 1
      %p72 = por %p70, %p71
      %p74 = scmp.ne.s32.totalorder %s59, %s73
      %p75 = scmp.eq.s32.totalorder %s28, 0
      %p76 = por %p74, %p75
      %s78 = sadd.s32 %s77, 1
      %p81 = scmp.eq.s32.totalorder %s22, 1
      %p82 = scmp.ne.s32.totalorder %s77, %s79
      %p83 = scmp.eq.s32.totalorder %s22, 0
      %p84 = por %p82, %p83
      %p85 = scmp.ne.s32.totalorder %s77, %s79
      %p86 = scmp.eq.s32.totalorder %s27, 1
      %p87 = por %p85, %p86
      %p88 = scmp.ne.s32.totalorder %s79, %s80
      %p89 = scmp.eq.s32.totalorder %s27, 0
      %p90 = por %p88, %p89
      %p91 = scmp.ne.s32.totalorder %s79, %s80
      %p92 = scmp.eq.s32.totalorder %s28, 1
      %p93 = por %p91, %p92
      %p95 = scmp.ne.s32.totalorder %s80, %s94
      %p96 = scmp.eq.s32.totalorder %s28, 0
      %p97 = por %p95, %p96
      %s99 = sadd.s32 %s98, 1
      %p102 = scmp.eq.s32.totalorder %s22, 1
      %p103 = scmp.ne.s32.totalorder %s98, %s100
      %p104 = scmp.eq.s32.totalorder %s22, 0
      %p105 = por %p103, %p104
      %p106 = scmp.ne.s32.totalorder %s98, %s100
      %p107 = scmp.eq.s32.totalorder %s27, 1
      %p108 = por %p106, %p107
      %p109 = scmp.ne.s32.totalorder %s100, %s101
      %p110 = scmp.eq.s32.totalorder %s27, 0
      %p111 = por %p109, %p110
      %p112 = scmp.ne.s32.totalorder %s100, %s101
      %p113 = scmp.eq.s32.totalorder %s28, 1
      %p114 = por %p112, %p113
      %p116 = scmp.ne.s32.totalorder %s101, %s115
      %p117 = scmp.eq.s32.totalorder %s28, 0
      %p118 = por %p116, %p117
      %s120 = sadd.s32 %s119, 1
      %p123 = scmp.eq.s32.totalorder %s22, 1
      %p124 = scmp.ne.s32.totalorder %s119, %s121
      %p125 = scmp.eq.s32.totalorder %s22, 0
      %p126 = por %p124, %p125
      %p127 = scmp.ne.s32.totalorder %s119, %s121
      %p128 = scmp.eq.s32.totalorder %s27, 1
      %p129 = por %p127, %p128
      %p130 = scmp.ne.s32.totalorder %s121, %s122
      %p131 = scmp.eq.s32.totalorder %s27, 0
      %p132 = por %p130, %p131
      %p133 = scmp.ne.s32.totalorder %s121, %s122
      %p134 = scmp.eq.s32.totalorder %s28, 1
      %p135 = por %p133, %p134
      %p137 = scmp.ne.s32.totalorder %s122, %s136
      %p138 = scmp.eq.s32.totalorder %s28, 0
      %p139 = por %p137, %p138
      %s141 = sadd.s32 %s140, 1
      %p144 = scmp.eq.s32.totalorder %s22, 1
      %p145 = scmp.ne.s32.totalorder %s140, %s142
      %p146 = scmp.eq.s32.totalorder %s22, 0
      %p147 = por %p145, %p146
      %p148 = scmp.ne.s32.totalorder %s140, %s142
      %p149 = scmp.eq.s32.totalorder %s27, 1
      %p150 = por %p148, %p149
      %p151 = scmp.ne.s32.totalorder %s142, %s143
      %p152 = scmp.eq.s32.totalorder %s27, 0
      %p153 = por %p151, %p152
      %p154 = scmp.ne.s32.totalorder %s142, %s143
      %p155 = scmp.eq.s32.totalorder %s28, 1
      %p156 = por %p154, %p155
      %p158 = scmp.ne.s32.totalorder %s143, %s157
      %p159 = scmp.eq.s32.totalorder %s28, 0
      %p160 = por %p158, %p159
      %s162 = sadd.s32 %s161, 1
      %p165 = scmp.eq.s32.totalorder %s22, 1
      %p166 = scmp.ne.s32.totalorder %s161, %s163
      %p167 = scmp.eq.s32.totalorder %s22, 0
      %p168 = por %p166, %p167
      %p169 = scmp.ne.s32.totalorder %s161, %s163
      %p170 = scmp.eq.s32.totalorder %s27, 1
      %p171 = por %p169, %p170
      %p172 = scmp.ne.s32.totalorder %s163, %s164
      %p173 = scmp.eq.s32.totalorder %s27, 0
      %p174 = por %p172, %p173
      %p175 = scmp.ne.s32.totalorder %s163, %s164
      %p176 = scmp.eq.s32.totalorder %s28, 1
      %p177 = por %p175, %p176
      %p179 = scmp.ne.s32.totalorder %s164, %s178
      %p180 = scmp.eq.s32.totalorder %s28, 0
      %p181 = por %p179, %p180
      %s183 = sadd.s32 %s182, 1
      %p186 = scmp.eq.s32.totalorder %s22, 1
      %p187 = scmp.ne.s32.totalorder %s182, %s184
      %p188 = scmp.eq.s32.totalorder %s22, 0
      %p189 = por %p187, %p188
      %p190 = scmp.ne.s32.totalorder %s182, %s184
      %p191 = scmp.eq.s32.totalorder %s27, 1
      %p192 = por %p190, %p191
      %p193 = scmp.ne.s32.totalorder %s184, %s185
      %p194 = scmp.eq.s32.totalorder %s27, 0
      %p195 = por %p193, %p194
      %p196 = scmp.ne.s32.totalorder %s184, %s185
      %p197 = scmp.eq.s32.totalorder %s28, 1
      %p198 = por %p196, %p197
      %p200 = scmp.ne.s32.totalorder %s185, %s199
      %p201 = scmp.eq.s32.totalorder %s28, 0
      %p202 = por %p200, %p201
      %s203 = ssub.s32 %s22, %s29
      %p204 = scmp.eq.s32.totalorder %s203, 0
      %s206 = sadd.s32 %s205, 1
      %s207 = scalar_select %p204, %s205, %s206
      %p210 = pneg %p204
      %p211 = scmp.eq.s32.totalorder %s22, 1
      %p212 = por %p210, %p211
      %p213 = scmp.ne.s32.totalorder %s205, %s208
      %p214 = scmp.eq.s32.totalorder %s22, 0
      %p215 = por %p213, %p214
      %p216 = scmp.ne.s32.totalorder %s205, %s208
      %p217 = scmp.eq.s32.totalorder %s27, 1
      %p218 = por %p216, %p217
      %p219 = scmp.ne.s32.totalorder %s208, %s209
      %p220 = scmp.eq.s32.totalorder %s27, 0
      %p221 = por %p219, %p220
      %p222 = scmp.ne.s32.totalorder %s208, %s209
      %p223 = scmp.eq.s32.totalorder %s28, 1
      %p224 = por %p222, %p223
      %p226 = scmp.ne.s32.totalorder %s209, %s225
      %p227 = scmp.eq.s32.totalorder %s28, 0
      %p228 = por %p226, %p227
      %p229 = scmp.le.s32.totalorder 1, %s22
      %p230 = scmp.lt.s32.totalorder %s22, 3
      %p231 = pnand %p229, %p230
      %p232 = pneg %p231
      // Predicated region
      $region9: #{tpu_custom_call.1} parent=5 // pred_check
        _
      $region10: #{tpu_custom_call.1} parent=5 // pred_check_branch
        %234 = sbr.rel (%p231) target = $region12
      $region11: #{tpu_custom_call.1} parent=5 // pred_region
        %s235 = ssub.s32 %s22, 1
        // Predicated region
        $region13: #{tpu_custom_call.1} parent=11 // pred_check
          %p236 = pneg %p69
        $region14: #{tpu_custom_call.1} parent=11 // pred_check_branch
          %238 = sbr.rel (%p236) target = $region16
        $region15: #{tpu_custom_call.1} parent=11 // pred_region
          %s240 = ssub.s32 2048, 2048
          %241 = vsyncadd [#allocation6], %s240
          %s242 = sshll.u32 [#allocation5], 4
          %s243 = int_to_ptr.vmem [resolvable:$true] %s242
          %248 = dma.hbm_to_vmem [thread:$0]  %s1, 2048, %s243, [#allocation6], 512, 512, 32
        $region16: #{tpu_custom_call.1} parent=11 // pred_fallthru
          _
        // Predicated region
        $region17: #{tpu_custom_call.1} parent=11 // pred_check
          %p249 = pneg %p90
        $region18: #{tpu_custom_call.1} parent=11 // pred_check_branch
          %251 = sbr.rel (%p249) target = $region20
        $region19: #{tpu_custom_call.1} parent=11 // pred_region
          _
        $region20: #{tpu_custom_call.1} parent=11 // pred_fallthru
          _
        // Predicated region
        $region21: #{tpu_custom_call.1} parent=11 // pred_check
          %p252 = pneg %p111
        $region22: #{tpu_custom_call.1} parent=11 // pred_check_branch
          %254 = sbr.rel (%p252) target = $region24
        $region23: #{tpu_custom_call.1} parent=11 // pred_region
          %s256 = ssub.s32 256, 256
          %257 = vsyncadd [#allocation6], %s256
          %s258 = sshll.u32 [#allocation7], 4
          %s259 = int_to_ptr.vmem [resolvable:$true] %s258
          %264 = dma.hbm_to_vmem [thread:$0]  %s3, 256, %s259, [#allocation6], 128, 128, 8
        $region24: #{tpu_custom_call.1} parent=11 // pred_fallthru
          _
        // Predicated region
        $region25: #{tpu_custom_call.1} parent=11 // pred_check
          %p265 = pneg %p132
        $region26: #{tpu_custom_call.1} parent=11 // pred_check_branch
          %267 = sbr.rel (%p265) target = $region28
        $region27: #{tpu_custom_call.1} parent=11 // pred_region
          %s269 = ssub.s32 2048, 2048
          %270 = vsyncadd [#allocation9], %s269
          %s271 = sshll.u32 [#allocation8], 4
          %s272 = int_to_ptr.vmem [resolvable:$true] %s271
          %277 = dma.hbm_to_vmem [thread:$0]  %s4, 2048, %s272, [#allocation9], 128, 128, 8
        $region28: #{tpu_custom_call.1} parent=11 // pred_fallthru
          _
        // Predicated region
        $region29: #{tpu_custom_call.1} parent=11 // pred_check
          %p278 = pneg %p153
        $region30: #{tpu_custom_call.1} parent=11 // pred_check_branch
          %280 = sbr.rel (%p278) target = $region32
        $region31: #{tpu_custom_call.1} parent=11 // pred_region
          _
        $region32: #{tpu_custom_call.1} parent=11 // pred_fallthru
          _
        // Predicated region
        $region33: #{tpu_custom_call.1} parent=11 // pred_check
          %p281 = pneg %p174
        $region34: #{tpu_custom_call.1} parent=11 // pred_check_branch
          %283 = sbr.rel (%p281) target = $region36
        $region35: #{tpu_custom_call.1} parent=11 // pred_region
          %s285 = ssub.s32 2048, 2048
          %286 = vsyncadd [#allocation9], %s285
          %s287 = sshll.u32 [#allocation10], 4
          %s288 = int_to_ptr.vmem [resolvable:$true] %s287
          %293 = dma.hbm_to_vmem [thread:$0]  %s6, 2048, %s288, [#allocation9], 128, 128, 8
        $region36: #{tpu_custom_call.1} parent=11 // pred_fallthru
          _
        // Predicated region
        $region37: #{tpu_custom_call.1} parent=11 // pred_check
          %p294 = pneg %p195
        $region38: #{tpu_custom_call.1} parent=11 // pred_check_branch
          %296 = sbr.rel (%p294) target = $region40
        $region39: #{tpu_custom_call.1} parent=11 // pred_region
          _
        $region40: #{tpu_custom_call.1} parent=11 // pred_fallthru
          _
      $region12: #{tpu_custom_call.1} parent=5 // pred_fallthru
        _
      %p297 = scmp.lt.s32.totalorder %s22, 2
      // Predicated region
      $region41: #{tpu_custom_call.1} parent=5 // pred_check
        %p298 = pneg %p297
      $region42: #{tpu_custom_call.1} parent=5 // pred_check_branch
        %300 = sbr.rel (%p298) target = $region44
      $region43: #{tpu_custom_call.1} parent=5 // pred_region
        // Predicated region
        $region45: #{tpu_custom_call.1} parent=43 // pred_check
          %p301 = pneg %p42
        $region46: #{tpu_custom_call.1} parent=43 // pred_check_branch
          %303 = sbr.rel (%p301) target = $region48
        $region47: #{tpu_custom_call.1} parent=43 // pred_region
          %s304 = sand.u32 %s32, 1
          %s305 = scalar_lea.sflag [#allocation3], %s304
          %s306 = sand.u32 %s32, 1
          %s307 = smul.addr %s306, 128
          %s308 = scalar_lea.vmem [#allocation2], %s307
          %s309 = smul.u32 8, %s22
          %s311 = ssub.s32 2048, 2048
          %312 = vsyncadd %s305, %s311
          %s313 = smul.addr %s309, 2
          %s314 = smul.addr %s313, 128
          %s315 = scalar_lea.hbm %s0, %s314
          %s316 = sshll.u32 %s308, 4
          %s317 = int_to_ptr.vmem [resolvable:$true] %s316
          %322 = dma.hbm_to_vmem [thread:$0]  %s315, 2048, %s317, %s305, 128, 128, 8
        $region48: #{tpu_custom_call.1} parent=43 // pred_fallthru
          _
      $region44: #{tpu_custom_call.1} parent=5 // pred_fallthru
        _
      %p323 = scmp.le.s32.totalorder 1, %s22
      %p324 = scmp.lt.s32.totalorder %s22, 3
      %p325 = pnand %p323, %p324
      %p326 = pneg %p325
      // Predicated region
      $region49: #{tpu_custom_call.1} parent=5 // pred_check
        _
      $region50: #{tpu_custom_call.1} parent=5 // pred_check_branch
        %328 = sbr.rel (%p325) target = $region52
      $region51: #{tpu_custom_call.1} parent=5 // pred_region
        %s329 = ssub.s32 %s22, 1
        %s330 = sand.u32 %s35, 1
        %s331 = scalar_lea.sflag [#allocation3], %s330
        %s332 = sand.u32 %s35, 1
        %s333 = smul.addr %s332, 128
        %s334 = scalar_lea.vmem [#allocation2], %s333
        // Predicated region
        $region53: #{tpu_custom_call.1} parent=51 // pred_check
          %p335 = pneg %p48
        $region54: #{tpu_custom_call.1} parent=51 // pred_check_branch
          %337 = sbr.rel (%p335) target = $region56
        $region55: #{tpu_custom_call.1} parent=51 // pred_region
          %338 = dma.done %s331, 2048
        $region56: #{tpu_custom_call.1} parent=51 // pred_fallthru
          _
        // Predicated region
        $region57: #{tpu_custom_call.1} parent=51 // pred_check
          %p339 = pneg %p69
        $region58: #{tpu_custom_call.1} parent=51 // pred_check_branch
          %341 = sbr.rel (%p339) target = $region60
        $region59: #{tpu_custom_call.1} parent=51 // pred_region
          %342 = dma.done [#allocation6], 2048
        $region60: #{tpu_custom_call.1} parent=51 // pred_fallthru
          _
        // Predicated region
        $region61: #{tpu_custom_call.1} parent=51 // pred_check
          %p343 = pneg %p111
        $region62: #{tpu_custom_call.1} parent=51 // pred_check_branch
          %345 = sbr.rel (%p343) target = $region64
        $region63: #{tpu_custom_call.1} parent=51 // pred_region
          %346 = dma.done [#allocation6], 256
        $region64: #{tpu_custom_call.1} parent=51 // pred_fallthru
          _
        // Predicated region
        $region65: #{tpu_custom_call.1} parent=51 // pred_check
          %p347 = pneg %p132
        $region66: #{tpu_custom_call.1} parent=51 // pred_check_branch
          %349 = sbr.rel (%p347) target = $region68
        $region67: #{tpu_custom_call.1} parent=51 // pred_region
          %350 = dma.done [#allocation9], 2048
        $region68: #{tpu_custom_call.1} parent=51 // pred_fallthru
          _
        // Predicated region
        $region69: #{tpu_custom_call.1} parent=51 // pred_check
          %p351 = pneg %p174
        $region70: #{tpu_custom_call.1} parent=51 // pred_check_branch
          %353 = sbr.rel (%p351) target = $region72
        $region71: #{tpu_custom_call.1} parent=51 // pred_region
          %354 = dma.done [#allocation9], 2048
        $region72: #{tpu_custom_call.1} parent=51 // pred_fallthru
          _
        %s355 = sand.u32 %s35, 1
        %s356 = scalar_lea.sflag [#allocation3], %s355
        %s357 = sand.u32 %s35, 1
        %s358 = smul.addr %s357, 128
        %s359 = scalar_lea.vmem [#allocation2], %s358
        %p360 = pneg %p48
        %p361 = pneg %p45
        %p362 = pneg %p69
        %p363 = pneg %p66
        %p364 = pneg %p90
        %p365 = pneg %p87
        %p366 = pneg %p111
        %p367 = pneg %p108
        %p368 = pneg %p132
        %p369 = pneg %p129
        %p370 = pneg %p153
        %p371 = pneg %p150
        %p372 = pneg %p174
        %p373 = pneg %p171
        %p374 = pneg %p195
        %p375 = pneg %p192
        %p376 = pneg %p221
        %p377 = pneg %p218
        %s378 = sand.u32 %s208, 1
        %s379 = scalar_lea.sflag [#allocation4], %s378
        %s380 = sand.u32 %s208, 1
        %s381 = smul.addr %s380, 8
        %s382 = scalar_lea.vmem [#allocation11], %s381
        %s383 = smul.u32 8, %s27
        %v384 = vld [vmem:[%s334] sm:$0xff]
        %v385 = vld [vmem:[%s334 + $0x8] sm:$0xff]
        %v386 = vld [vmem:[%s334 + $0x10] sm:$0xff]
        %v387 = vld [vmem:[%s334 + $0x18] sm:$0xff]
        %v388 = vld [vmem:[%s334 + $0x20] sm:$0xff]
        %v389 = vld [vmem:[%s334 + $0x28] sm:$0xff]
        %v390 = vld [vmem:[%s334 + $0x30] sm:$0xff]
        %v391 = vld [vmem:[%s334 + $0x38] sm:$0xff]
        %v392 = vld [vmem:[%s334 + $0x40] sm:$0xff]
        %v393 = vld [vmem:[%s334 + $0x48] sm:$0xff]
        %v394 = vld [vmem:[%s334 + $0x50] sm:$0xff]
        %v395 = vld [vmem:[%s334 + $0x58] sm:$0xff]
        %v396 = vld [vmem:[%s334 + $0x60] sm:$0xff]
        %v397 = vld [vmem:[%s334 + $0x68] sm:$0xff]
        %v398 = vld [vmem:[%s334 + $0x70] sm:$0xff]
        %v399 = vld [vmem:[%s334 + $0x78] sm:$0xff]
        %v400 = vld [vmem:[#allocation5] sm:$0xff]
        %v401 = vld [vmem:[#allocation5 + $0x8] sm:$0xff]
        %v402 = vld [vmem:[#allocation5 + $0x10] sm:$0xff]
        %v403 = vld [vmem:[#allocation5 + $0x18] sm:$0xff]
        %v404 = vld [vmem:[#allocation5 + $0x20] sm:$0xff]
        %v405 = vld [vmem:[#allocation5 + $0x28] sm:$0xff]
        %v406 = vld [vmem:[#allocation5 + $0x30] sm:$0xff]
        %v407 = vld [vmem:[#allocation5 + $0x38] sm:$0xff]
        %v408 = vld [vmem:[#allocation5 + $0x40] sm:$0xff]
        %v409 = vld [vmem:[#allocation5 + $0x48] sm:$0xff]
        %v410 = vld [vmem:[#allocation5 + $0x50] sm:$0xff]
        %v411 = vld [vmem:[#allocation5 + $0x58] sm:$0xff]
        %v412 = vld [vmem:[#allocation5 + $0x60] sm:$0xff]
        %v413 = vld [vmem:[#allocation5 + $0x68] sm:$0xff]
        %v414 = vld [vmem:[#allocation5 + $0x70] sm:$0xff]
        %v415 = vld [vmem:[#allocation5 + $0x78] sm:$0xff]
        %vm416 = vcmask 261120
        %v418 = vsel %vm416, %v384, 0
        %v421 = vsel %vm416, %v385, 0
        %v424 = vsel %vm416, %v386, 0
        %v427 = vsel %vm416, %v387, 0
        %v430 = vsel %vm416, %v388, 0
        %v433 = vsel %vm416, %v389, 0
        %v436 = vsel %vm416, %v390, 0
        %v439 = vsel %vm416, %v391, 0
        %v442 = vsel %vm416, %v392, 0
        %v445 = vsel %vm416, %v393, 0
        %v448 = vsel %vm416, %v394, 0
        %v451 = vsel %vm416, %v395, 0
        %v454 = vsel %vm416, %v396, 0
        %v457 = vsel %vm416, %v397, 0
        %v460 = vsel %vm416, %v398, 0
        %v463 = vsel %vm416, %v399, 0
        %465 = vmatprep.subr.mxu0 %v401
        %466 = vmatpush1.msra.mxu0 %v400
        %467 = vmatprep.subr.mxu0 %v405
        %468 = vmatpush1.msra.mxu0 %v404
        %469 = vmatprep.subr.mxu0 %v409
        %470 = vmatpush1.msra.mxu0 %v408
        %471 = vmatprep.subr.mxu0 %v413
        %472 = vmatpush1.msra.mxu0 %v412
        %473 = vmatprep.subr.mxu0 0.0
        %474 = vmatpush1.msra.mxu0 0.0
        %475 = vmatprep.subr.mxu0 0.0
        %476 = vmatpush1.msra.mxu0 0.0
        %477 = vmatprep.subr.mxu0 0.0
        %478 = vmatpush1.msra.mxu0 0.0
        %479 = vmatprep.subr.mxu0 0.0
        %480 = vmatpush1.msra.mxu0 0.0
        %481 = vmatprep.subr.mxu0 0.0
        %482 = vmatpush1.msra.mxu0 0.0
        %483 = vmatprep.subr.mxu0 0.0
        %484 = vmatpush1.msra.mxu0 0.0
        %485 = vmatprep.subr.mxu0 0.0
        %486 = vmatpush1.msra.mxu0 0.0
        %487 = vmatprep.subr.mxu0 0.0
        %488 = vmatpush1.msra.mxu0 0.0
        %489 = vmatprep.subr.mxu0 0.0
        %490 = vmatpush1.msra.mxu0 0.0
        %491 = vmatprep.subr.mxu0 0.0
        %492 = vmatpush1.msra.mxu0 0.0
        %493 = vmatprep.subr.mxu0 0.0
        %494 = vmatpush1.msra.mxu0 0.0
        %495 = vmatprep.subr.mxu0 0.0
        %496 = vmatpush1.msra.mxu0 0.0
        %497 = vmatprep.subr.mxu0 0.0
        %498 = vmatpush1.msra.mxu0 0.0
        %499 = vmatprep.subr.mxu0 0.0
        %500 = vmatpush1.msra.mxu0 0.0
        %501 = vmatprep.subr.mxu0 0.0
        %502 = vmatpush1.msra.mxu0 0.0
        %503 = vmatprep.subr.mxu0 0.0
        %504 = vmatpush1.msra.mxu0 0.0
        %505 = vmatprep.subr.mxu0 0.0
        %506 = vmatpush1.msra.mxu0 0.0
        %507 = vmatprep.subr.mxu0 0.0
        %508 = vmatpush1.msra.mxu0 0.0
        %509 = vmatprep.subr.mxu0 0.0
        %510 = vmatpush1.msra.mxu0 0.0
        %511 = vmatprep.subr.mxu0 0.0
        %512 = vmatpush1.msra.mxu0 0.0
        %513 = vmatprep.subr.mxu0 0.0
        %514 = vmatpush1.msra.mxu0 0.0
        %515 = vmatprep.subr.mxu0 0.0
        %516 = vmatpush1.msra.mxu0 0.0
        %517 = vmatprep.subr.mxu0 0.0
        %518 = vmatpush1.msra.mxu0 0.0
        %519 = vmatprep.subr.mxu0 0.0
        %520 = vmatpush1.msra.mxu0 0.0
        %521 = vmatprep.subr.mxu0 0.0
        %522 = vmatpush1.msra.mxu0 0.0
        %523 = vmatprep.subr.mxu0 0.0
        %524 = vmatpush1.msra.mxu0 0.0
        %525 = vmatprep.subr.mxu0 0.0
        %526 = vmatpush1.msra.mxu0 0.0
        %527 = vmatprep.subr.mxu0 0.0
        %528 = vmatpush1.msra.mxu0 0.0
        %529 = vmatprep.mubr.f32.mxu0 0.0
        %530 = vmatmul.mubr.f32.gmra.mrb[0].mxu0 %v418
        %v531 = vpop.f32.mrb[0].mxu0
        %v532 = vadd.f32 0.0, %v531
        %v533 = vpop.f32.mrb[0].mxu0
        %v534 = vadd.f32 0.0, %v533
        %535 = vmatprep.mubr.f32.mxu0 0.0
        %536 = vmatmul.mubr.f32.gmra.mrb[0].mxu0 %v421
        %v537 = vpop.f32.mrb[0].mxu0
        %v538 = vadd.f32 0.0, %v537
        %v539 = vpop.f32.mrb[0].mxu0
        %v540 = vadd.f32 0.0, %v539
        %541 = vmatprep.mubr.f32.mxu0 0.0
        %542 = vmatmul.mubr.f32.gmra.mrb[0].mxu0 %v424
        %v543 = vpop.f32.mrb[0].mxu0
        %v544 = vadd.f32 0.0, %v543
        %v545 = vpop.f32.mrb[0].mxu0
        %v546 = vadd.f32 0.0, %v545
        %547 = vmatprep.mubr.f32.mxu0 0.0
        %548 = vmatmul.mubr.f32.gmra.mrb[0].mxu0 %v427
        %v549 = vpop.f32.mrb[0].mxu0
        %v550 = vadd.f32 0.0, %v549
        %v551 = vpop.f32.mrb[0].mxu0
        %v552 = vadd.f32 0.0, %v551
        %553 = vmatprep.mubr.f32.mxu0 0.0
        %554 = vmatmul.mubr.f32.gmra.mrb[0].mxu0 %v430
        %v555 = vpop.f32.mrb[0].mxu0
        %v556 = vadd.f32 0.0, %v555
        %v557 = vpop.f32.mrb[0].mxu0
        %v558 = vadd.f32 0.0, %v557
        %559 = vmatprep.mubr.f32.mxu0 0.0
        %560 = vmatmul.mubr.f32.gmra.mrb[0].mxu0 %v433
        %v561 = vpop.f32.mrb[0].mxu0
        %v562 = vadd.f32 0.0, %v561
        %v563 = vpop.f32.mrb[0].mxu0
        %v564 = vadd.f32 0.0, %v563
        %565 = vmatprep.mubr.f32.mxu0 0.0
        %566 = vmatmul.mubr.f32.gmra.mrb[0].mxu0 %v436
        %v567 = vpop.f32.mrb[0].mxu0
        %v568 = vadd.f32 0.0, %v567
        %v569 = vpop.f32.mrb[0].mxu0
        %v570 = vadd.f32 0.0, %v569
        %571 = vmatprep.mubr.f32.mxu0 0.0
        %572 = vmatmul.mubr.f32.gmra.mrb[0].mxu0 %v439
        %v573 = vpop.f32.mrb[0].mxu0
        %v574 = vadd.f32 0.0, %v573
        %v575 = vpop.f32.mrb[0].mxu0
        %v576 = vadd.f32 0.0, %v575
        %577 = vmatprep.mubr.f32.mxu0 0.0
        %578 = vmatmul.mubr.f32.gmra.mrb[0].mxu0 %v442
        %v579 = vpop.f32.mrb[0].mxu0
        %v580 = vadd.f32 0.0, %v579
        %v581 = vpop.f32.mrb[0].mxu0
        %v582 = vadd.f32 0.0, %v581
        %583 = vmatprep.mubr.f32.mxu0 0.0
        %584 = vmatmul.mubr.f32.gmra.mrb[0].mxu0 %v445
        %v585 = vpop.f32.mrb[0].mxu0
        %v586 = vadd.f32 0.0, %v585
        %v587 = vpop.f32.mrb[0].mxu0
        %v588 = vadd.f32 0.0, %v587
        %589 = vmatprep.mubr.f32.mxu0 0.0
        %590 = vmatmul.mubr.f32.gmra.mrb[0].mxu0 %v448
        %v591 = vpop.f32.mrb[0].mxu0
        %v592 = vadd.f32 0.0, %v591
        %v593 = vpop.f32.mrb[0].mxu0
        %v594 = vadd.f32 0.0, %v593
        %595 = vmatprep.mubr.f32.mxu0 0.0
        %596 = vmatmul.mubr.f32.gmra.mrb[0].mxu0 %v451
        %v597 = vpop.f32.mrb[0].mxu0
        %v598 = vadd.f32 0.0, %v597
        %v599 = vpop.f32.mrb[0].mxu0
        %v600 = vadd.f32 0.0, %v599
        %601 = vmatprep.mubr.f32.mxu0 0.0
        %602 = vmatmul.mubr.f32.gmra.mrb[0].mxu0 %v454
        %v603 = vpop.f32.mrb[0].mxu0
        %v604 = vadd.f32 0.0, %v603
        %v605 = vpop.f32.mrb[0].mxu0
        %v606 = vadd.f32 0.0, %v605
        %607 = vmatprep.mubr.f32.mxu0 0.0
        %608 = vmatmul.mubr.f32.gmra.mrb[0].mxu0 %v457
        %v609 = vpop.f32.mrb[0].mxu0
        %v610 = vadd.f32 0.0, %v609
        %v611 = vpop.f32.mrb[0].mxu0
        %v612 = vadd.f32 0.0, %v611
        %613 = vmatprep.mubr.f32.mxu0 0.0
        %614 = vmatmul.mubr.f32.gmra.mrb[0].mxu0 %v460
        %v615 = vpop.f32.mrb[0].mxu0
        %v616 = vadd.f32 0.0, %v615
        %v617 = vpop.f32.mrb[0].mxu0
        %v618 = vadd.f32 0.0, %v617
        %619 = vmatprep.mubr.f32.mxu0 0.0
        %620 = vmatmul.mubr.f32.gmra.mrb[0].mxu0 %v463
        %v621 = vpop.f32.mrb[0].mxu0
        %v622 = vadd.f32 0.0, %v621
        %v623 = vpop.f32.mrb[0].mxu0
        %v624 = vadd.f32 0.0, %v623
        %625 = vdwg.mxu0
        %626 = vmatprep.subr.mxu0 %v403
        %627 = vmatpush1.msra.mxu0 %v402
        %628 = vmatprep.subr.mxu0 %v407
        %629 = vmatpush1.msra.mxu0 %v406
        %630 = vmatprep.subr.mxu0 %v411
        %631 = vmatpush1.msra.mxu0 %v410
        %632 = vmatprep.subr.mxu0 %v415
        %633 = vmatpush1.msra.mxu0 %v414
        %634 = vmatprep.subr.mxu0 0.0
        %635 = vmatpush1.msra.mxu0 0.0
        %636 = vmatprep.subr.mxu0 0.0
        %637 = vmatpush1.msra.mxu0 0.0
        %638 = vmatprep.subr.mxu0 0.0
        %639 = vmatpush1.msra.mxu0 0.0
        %640 = vmatprep.subr.mxu0 0.0
        %641 = vmatpush1.msra.mxu0 0.0
        %642 = vmatprep.subr.mxu0 0.0
        %643 = vmatpush1.msra.mxu0 0.0
        %644 = vmatprep.subr.mxu0 0.0
        %645 = vmatpush1.msra.mxu0 0.0
        %646 = vmatprep.subr.mxu0 0.0
        %647 = vmatpush1.msra.mxu0 0.0
        %648 = vmatprep.subr.mxu0 0.0
        %649 = vmatpush1.msra.mxu0 0.0
        %650 = vmatprep.subr.mxu0 0.0
        %651 = vmatpush1.msra.mxu0 0.0
        %652 = vmatprep.subr.mxu0 0.0
        %653 = vmatpush1.msra.mxu0 0.0
        %654 = vmatprep.subr.mxu0 0.0
        %655 = vmatpush1.msra.mxu0 0.0
        %656 = vmatprep.subr.mxu0 0.0
        %657 = vmatpush1.msra.mxu0 0.0
        %658 = vmatprep.subr.mxu0 0.0
        %659 = vmatpush1.msra.mxu0 0.0
        %660 = vmatprep.subr.mxu0 0.0
        %661 = vmatpush1.msra.mxu0 0.0
        %662 = vmatprep.subr.mxu0 0.0
        %663 = vmatpush1.msra.mxu0 0.0
        %664 = vmatprep.subr.mxu0 0.0
        %665 = vmatpush1.msra.mxu0 0.0
        %666 = vmatprep.subr.mxu0 0.0
        %667 = vmatpush1.msra.mxu0 0.0
        %668 = vmatprep.subr.mxu0 0.0
        %669 = vmatpush1.msra.mxu0 0.0
        %670 = vmatprep.subr.mxu0 0.0
        %671 = vmatpush1.msra.mxu0 0.0
        %672 = vmatprep.subr.mxu0 0.0
        %673 = vmatpush1.msra.mxu0 0.0
        %674 = vmatprep.subr.mxu0 0.0
        %675 = vmatpush1.msra.mxu0 0.0
        %676 = vmatprep.subr.mxu0 0.0
        %677 = vmatpush1.msra.mxu0 0.0
        %678 = vmatprep.subr.mxu0 0.0
        %679 = vmatpush1.msra.mxu0 0.0
        %680 = vmatprep.subr.mxu0 0.0
        %681 = vmatpush1.msra.mxu0 0.0
        %682 = vmatprep.subr.mxu0 0.0
        %683 = vmatpush1.msra.mxu0 0.0
        %684 = vmatprep.subr.mxu0 0.0
        %685 = vmatpush1.msra.mxu0 0.0
        %686 = vmatprep.subr.mxu0 0.0
        %687 = vmatpush1.msra.mxu0 0.0
        %688 = vmatprep.subr.mxu0 0.0
        %689 = vmatpush1.msra.mxu0 0.0
        %690 = vmatprep.mubr.f32.mxu0 0.0
        %691 = vmatmul.mubr.f32.gmra.mrb[0].mxu0 %v418
        %v692 = vpop.f32.mrb[0].mxu0
        %v693 = vadd.f32 0.0, %v692
        %v694 = vpop.f32.mrb[0].mxu0
        %v695 = vadd.f32 0.0, %v694
        %696 = vmatprep.mubr.f32.mxu0 0.0
        %697 = vmatmul.mubr.f32.gmra.mrb[0].mxu0 %v421
        %v698 = vpop.f32.mrb[0].mxu0
        %v699 = vadd.f32 0.0, %v698
        %v700 = vpop.f32.mrb[0].mxu0
        %v701 = vadd.f32 0.0, %v700
        %702 = vmatprep.mubr.f32.mxu0 0.0
        %703 = vmatmul.mubr.f32.gmra.mrb[0].mxu0 %v424
        %v704 = vpop.f32.mrb[0].mxu0
        %v705 = vadd.f32 0.0, %v704
        %v706 = vpop.f32.mrb[0].mxu0
        %v707 = vadd.f32 0.0, %v706
        %708 = vmatprep.mubr.f32.mxu0 0.0
        %709 = vmatmul.mubr.f32.gmra.mrb[0].mxu0 %v427
        %v710 = vpop.f32.mrb[0].mxu0
        %v711 = vadd.f32 0.0, %v710
        %v712 = vpop.f32.mrb[0].mxu0
        %v713 = vadd.f32 0.0, %v712
        %714 = vmatprep.mubr.f32.mxu0 0.0
        %715 = vmatmul.mubr.f32.gmra.mrb[0].mxu0 %v430
        %v716 = vpop.f32.mrb[0].mxu0
        %v717 = vadd.f32 0.0, %v716
        %v718 = vpop.f32.mrb[0].mxu0
        %v719 = vadd.f32 0.0, %v718
        %720 = vmatprep.mubr.f32.mxu0 0.0
        %721 = vmatmul.mubr.f32.gmra.mrb[0].mxu0 %v433
        %v722 = vpop.f32.mrb[0].mxu0
        %v723 = vadd.f32 0.0, %v722
        %v724 = vpop.f32.mrb[0].mxu0
        %v725 = vadd.f32 0.0, %v724
        %726 = vmatprep.mubr.f32.mxu0 0.0
        %727 = vmatmul.mubr.f32.gmra.mrb[0].mxu0 %v436
        %v728 = vpop.f32.mrb[0].mxu0
        %v729 = vadd.f32 0.0, %v728
        %v730 = vpop.f32.mrb[0].mxu0
        %v731 = vadd.f32 0.0, %v730
        %732 = vmatprep.mubr.f32.mxu0 0.0
        %733 = vmatmul.mubr.f32.gmra.mrb[0].mxu0 %v439
        %v734 = vpop.f32.mrb[0].mxu0
        %v735 = vadd.f32 0.0, %v734
        %v736 = vpop.f32.mrb[0].mxu0
        %v737 = vadd.f32 0.0, %v736
        %738 = vmatprep.mubr.f32.mxu0 0.0
        %739 = vmatmul.mubr.f32.gmra.mrb[0].mxu0 %v442
        %v740 = vpop.f32.mrb[0].mxu0
        %v741 = vadd.f32 0.0, %v740
        %v742 = vpop.f32.mrb[0].mxu0
        %v743 = vadd.f32 0.0, %v742
        %744 = vmatprep.mubr.f32.mxu0 0.0
        %745 = vmatmul.mubr.f32.gmra.mrb[0].mxu0 %v445
        %v746 = vpop.f32.mrb[0].mxu0
        %v747 = vadd.f32 0.0, %v746
        %v748 = vpop.f32.mrb[0].mxu0
        %v749 = vadd.f32 0.0, %v748
        %750 = vmatprep.mubr.f32.mxu0 0.0
        %751 = vmatmul.mubr.f32.gmra.mrb[0].mxu0 %v448
        %v752 = vpop.f32.mrb[0].mxu0
        %v753 = vadd.f32 0.0, %v752
        %v754 = vpop.f32.mrb[0].mxu0
        %v755 = vadd.f32 0.0, %v754
        %756 = vmatprep.mubr.f32.mxu0 0.0
        %757 = vmatmul.mubr.f32.gmra.mrb[0].mxu0 %v451
        %v758 = vpop.f32.mrb[0].mxu0
        %v759 = vadd.f32 0.0, %v758
        %v760 = vpop.f32.mrb[0].mxu0
        %v761 = vadd.f32 0.0, %v760
        %762 = vmatprep.mubr.f32.mxu0 0.0
        %763 = vmatmul.mubr.f32.gmra.mrb[0].mxu0 %v454
        %v764 = vpop.f32.mrb[0].mxu0
        %v765 = vadd.f32 0.0, %v764
        %v766 = vpop.f32.mrb[0].mxu0
        %v767 = vadd.f32 0.0, %v766
        %768 = vmatprep.mubr.f32.mxu0 0.0
        %769 = vmatmul.mubr.f32.gmra.mrb[0].mxu0 %v457
        %v770 = vpop.f32.mrb[0].mxu0
        %v771 = vadd.f32 0.0, %v770
        %v772 = vpop.f32.mrb[0].mxu0
        %v773 = vadd.f32 0.0, %v772
        %774 = vmatprep.mubr.f32.mxu0 0.0
        %775 = vmatmul.mubr.f32.gmra.mrb[0].mxu0 %v460
        %v776 = vpop.f32.mrb[0].mxu0
        %v777 = vadd.f32 0.0, %v776
        %v778 = vpop.f32.mrb[0].mxu0
        %v779 = vadd.f32 0.0, %v778
        %780 = vmatprep.mubr.f32.mxu0 0.0
        %781 = vmatmul.mubr.f32.gmra.mrb[0].mxu0 %v463
        %v782 = vpop.f32.mrb[0].mxu0
        %v783 = vadd.f32 0.0, %v782
        %v784 = vpop.f32.mrb[0].mxu0
        %v785 = vadd.f32 0.0, %v784
        %786 = vdwg.mxu0
        %v787 = vrot.slane %v534, 1
        %v788 = vrot.slane %v540, 1
        %v789 = vrot.slane %v546, 1
        %v790 = vrot.slane %v552, 1
        %v791 = vrot.slane %v558, 1
        %v792 = vrot.slane %v564, 1
        %v793 = vrot.slane %v570, 1
        %v794 = vrot.slane %v576, 1
        %v795 = vrot.slane %v582, 1
        %v796 = vrot.slane %v588, 1
        %v797 = vrot.slane %v594, 1
        %v798 = vrot.slane %v600, 1
        %v799 = vrot.slane %v606, 1
        %v800 = vrot.slane %v612, 1
        %v801 = vrot.slane %v618, 1
        %v802 = vrot.slane %v624, 1
        %v803 = vlaneseq
        %v804 = vshrl.u32 %v803, 7
        %vm805 = vcmp.lt.s32.totalorder %v804, 7
        %v806 = vsel %vm805, %v801, %v802
        %v807 = vsel %vm805, %v800, %v801
        %v808 = vsel %vm805, %v799, %v800
        %v809 = vsel %vm805, %v798, %v799
        %v810 = vsel %vm805, %v797, %v798
        %v811 = vsel %vm805, %v796, %v797
        %v812 = vsel %vm805, %v795, %v796
        %v813 = vsel %vm805, %v794, %v795
        %v814 = vsel %vm805, %v793, %v794
        %v815 = vsel %vm805, %v792, %v793
        %v816 = vsel %vm805, %v791, %v792
        %v817 = vsel %vm805, %v790, %v791
        %v818 = vsel %vm805, %v789, %v790
        %v819 = vsel %vm805, %v788, %v789
        %v820 = vsel %vm805, %v787, %v788
        %v821 = vsel %vm805, %v802, %v787
        %v822 = vadd.f32 %v532, %v820
        %v823 = vadd.f32 %v538, %v819
        %v824 = vadd.f32 %v544, %v818
        %v825 = vadd.f32 %v550, %v817
        %v826 = vadd.f32 %v556, %v816
        %v827 = vadd.f32 %v562, %v815
        %v828 = vadd.f32 %v568, %v814
        %v829 = vadd.f32 %v574, %v813
        %v830 = vadd.f32 %v580, %v812
        %v831 = vadd.f32 %v586, %v811
        %v832 = vadd.f32 %v592, %v810
        %v833 = vadd.f32 %v598, %v809
        %v834 = vadd.f32 %v604, %v808
        %v835 = vadd.f32 %v610, %v807
        %v836 = vadd.f32 %v616, %v806
        %v837 = vadd.f32 %v622, %v821
        %v838 = vrot.slane %v693, 2
        %v839 = vrot.slane %v699, 2
        %v840 = vrot.slane %v705, 2
        %v841 = vrot.slane %v711, 2
        %v842 = vrot.slane %v717, 2
        %v843 = vrot.slane %v723, 2
        %v844 = vrot.slane %v729, 2
        %v845 = vrot.slane %v735, 2
        %v846 = vrot.slane %v741, 2
        %v847 = vrot.slane %v747, 2
        %v848 = vrot.slane %v753, 2
        %v849 = vrot.slane %v759, 2
        %v850 = vrot.slane %v765, 2
        %v851 = vrot.slane %v771, 2
        %v852 = vrot.slane %v777, 2
        %v853 = vrot.slane %v783, 2
        %vm854 = vcmp.lt.s32.totalorder %v804, 6
        %v855 = vsel %vm854, %v852, %v853
        %v856 = vsel %vm854, %v851, %v852
        %v857 = vsel %vm854, %v850, %v851
        %v858 = vsel %vm854, %v849, %v850
        %v859 = vsel %vm854, %v848, %v849
        %v860 = vsel %vm854, %v847, %v848
        %v861 = vsel %vm854, %v846, %v847
        %v862 = vsel %vm854, %v845, %v846
        %v863 = vsel %vm854, %v844, %v845
        %v864 = vsel %vm854, %v843, %v844
        %v865 = vsel %vm854, %v842, %v843
        %v866 = vsel %vm854, %v841, %v842
        %v867 = vsel %vm854, %v840, %v841
        %v868 = vsel %vm854, %v839, %v840
        %v869 = vsel %vm854, %v838, %v839
        %v870 = vsel %vm854, %v853, %v838
        %v871 = vadd.f32 %v822, %v869
        %v872 = vadd.f32 %v823, %v868
        %v873 = vadd.f32 %v824, %v867
        %v874 = vadd.f32 %v825, %v866
        %v875 = vadd.f32 %v826, %v865
        %v876 = vadd.f32 %v827, %v864
        %v877 = vadd.f32 %v828, %v863
        %v878 = vadd.f32 %v829, %v862
        %v879 = vadd.f32 %v830, %v861
        %v880 = vadd.f32 %v831, %v860
        %v881 = vadd.f32 %v832, %v859
        %v882 = vadd.f32 %v833, %v858
        %v883 = vadd.f32 %v834, %v857
        %v884 = vadd.f32 %v835, %v856
        %v885 = vadd.f32 %v836, %v855
        %v886 = vadd.f32 %v837, %v870
        %v887 = vrot.slane %v695, 3
        %v888 = vrot.slane %v701, 3
        %v889 = vrot.slane %v707, 3
        %v890 = vrot.slane %v713, 3
        %v891 = vrot.slane %v719, 3
        %v892 = vrot.slane %v725, 3
        %v893 = vrot.slane %v731, 3
        %v894 = vrot.slane %v737, 3
        %v895 = vrot.slane %v743, 3
        %v896 = vrot.slane %v749, 3
        %v897 = vrot.slane %v755, 3
        %v898 = vrot.slane %v761, 3
        %v899 = vrot.slane %v767, 3
        %v900 = vrot.slane %v773, 3
        %v901 = vrot.slane %v779, 3
        %v902 = vrot.slane %v785, 3
        %vm903 = vcmp.lt.s32.totalorder %v804, 5
        %v904 = vsel %vm903, %v901, %v902
        %v905 = vsel %vm903, %v900, %v901
        %v906 = vsel %vm903, %v899, %v900
        %v907 = vsel %vm903, %v898, %v899
        %v908 = vsel %vm903, %v897, %v898
        %v909 = vsel %vm903, %v896, %v897
        %v910 = vsel %vm903, %v895, %v896
        %v911 = vsel %vm903, %v894, %v895
        %v912 = vsel %vm903, %v893, %v894
        %v913 = vsel %vm903, %v892, %v893
        %v914 = vsel %vm903, %v891, %v892
        %v915 = vsel %vm903, %v890, %v891
        %v916 = vsel %vm903, %v889, %v890
        %v917 = vsel %vm903, %v888, %v889
        %v918 = vsel %vm903, %v887, %v888
        %v919 = vsel %vm903, %v902, %v887
        %v920 = vadd.f32 %v871, %v918
        %v921 = vadd.f32 %v872, %v917
        %v922 = vadd.f32 %v873, %v916
        %v923 = vadd.f32 %v874, %v915
        %v924 = vadd.f32 %v875, %v914
        %v925 = vadd.f32 %v876, %v913
        %v926 = vadd.f32 %v877, %v912
        %v927 = vadd.f32 %v878, %v911
        %v928 = vadd.f32 %v879, %v910
        %v929 = vadd.f32 %v880, %v909
        %v930 = vadd.f32 %v881, %v908
        %v931 = vadd.f32 %v882, %v907
        %v932 = vadd.f32 %v883, %v906
        %v933 = vadd.f32 %v884, %v905
        %v934 = vadd.f32 %v885, %v904
        %v935 = vadd.f32 %v886, %v919
        %v936 = vld [vmem:[#allocation7] sm:$0xff]
        %v937 = vld [vmem:[#allocation7 + $0x8] sm:$0xff]
        %v938 = vadd.f32 %v920, %v936
        %v939 = vadd.f32 %v921, %v937
        %v940 = vadd.f32 %v922, %v936
        %v941 = vadd.f32 %v923, %v937
        %v942 = vadd.f32 %v924, %v936
        %v943 = vadd.f32 %v925, %v937
        %v944 = vadd.f32 %v926, %v936
        %v945 = vadd.f32 %v927, %v937
        %v946 = vadd.f32 %v928, %v936
        %v947 = vadd.f32 %v929, %v937
        %v948 = vadd.f32 %v930, %v936
        %v949 = vadd.f32 %v931, %v937
        %v950 = vadd.f32 %v932, %v936
        %v951 = vadd.f32 %v933, %v937
        %v952 = vadd.f32 %v934, %v936
        %v953 = vadd.f32 %v935, %v937
        %v954 = vmax.f32 %v938, %v939
        %v955 = vrot.slane %v954, 4
        %v956 = vmax.f32 %v954, %v955
        %v957 = vrot.slane %v956, 2
        %v958 = vmax.f32 %v956, %v957
        %v959 = vrot.slane %v958, 1
        %v960 = vmax.f32 %v958, %v959
        %v961 = vmax.f32 %v940, %v941
        %v962 = vrot.slane %v961, 4
        %v963 = vmax.f32 %v961, %v962
        %v964 = vrot.slane %v963, 2
        %v965 = vmax.f32 %v963, %v964
        %v966 = vrot.slane %v965, 1
        %v967 = vmax.f32 %v965, %v966
        %v968 = vmax.f32 %v942, %v943
        %v969 = vrot.slane %v968, 4
        %v970 = vmax.f32 %v968, %v969
        %v971 = vrot.slane %v970, 2
        %v972 = vmax.f32 %v970, %v971
        %v973 = vrot.slane %v972, 1
        %v974 = vmax.f32 %v972, %v973
        %v975 = vmax.f32 %v944, %v945
        %v976 = vrot.slane %v975, 4
        %v977 = vmax.f32 %v975, %v976
        %v978 = vrot.slane %v977, 2
        %v979 = vmax.f32 %v977, %v978
        %v980 = vrot.slane %v979, 1
        %v981 = vmax.f32 %v979, %v980
        %v982 = vmax.f32 %v946, %v947
        %v983 = vrot.slane %v982, 4
        %v984 = vmax.f32 %v982, %v983
        %v985 = vrot.slane %v984, 2
        %v986 = vmax.f32 %v984, %v985
        %v987 = vrot.slane %v986, 1
        %v988 = vmax.f32 %v986, %v987
        %v989 = vmax.f32 %v948, %v949
        %v990 = vrot.slane %v989, 4
        %v991 = vmax.f32 %v989, %v990
        %v992 = vrot.slane %v991, 2
        %v993 = vmax.f32 %v991, %v992
        %v994 = vrot.slane %v993, 1
        %v995 = vmax.f32 %v993, %v994
        %v996 = vmax.f32 %v950, %v951
        %v997 = vrot.slane %v996, 4
        %v998 = vmax.f32 %v996, %v997
        %v999 = vrot.slane %v998, 2
        %v1000 = vmax.f32 %v998, %v999
        %v1001 = vrot.slane %v1000, 1
        %v1002 = vmax.f32 %v1000, %v1001
        %v1003 = vmax.f32 %v952, %v953
        %v1004 = vrot.slane %v1003, 4
        %v1005 = vmax.f32 %v1003, %v1004
        %v1006 = vrot.slane %v1005, 2
        %v1007 = vmax.f32 %v1005, %v1006
        %v1008 = vrot.slane %v1007, 1
        %v1009 = vmax.f32 %v1007, %v1008
        %v1010 = vld [vmem:[%s2] sm:$0x1]
        %v1012 = vlaneseq
        %v1013 = vshrl.u32 %v1012, 7
        %v1014 = vsub.s32 0, %v1013
        %v1015 = vrot.slane %v1010, %v1014
        %v1017 = vadd.f32 %v960, %v1015
        %v1018 = vadd.f32 %v967, %v1015
        %v1019 = vadd.f32 %v974, %v1015
        %v1020 = vadd.f32 %v981, %v1015
        %v1021 = vadd.f32 %v988, %v1015
        %v1022 = vadd.f32 %v995, %v1015
        %v1023 = vadd.f32 %v1002, %v1015
        %v1024 = vadd.f32 %v1009, %v1015
        %v1025 = vld [vmem:[#allocation8] sm:$0xff]
        %v1026 = vld [vmem:[#allocation8 + $0x8] sm:$0xff]
        %v1027 = vld [vmem:[#allocation8 + $0x10] sm:$0xff]
        %v1028 = vld [vmem:[#allocation8 + $0x18] sm:$0xff]
        %v1029 = vld [vmem:[#allocation8 + $0x20] sm:$0xff]
        %v1030 = vld [vmem:[#allocation8 + $0x28] sm:$0xff]
        %v1031 = vld [vmem:[#allocation8 + $0x30] sm:$0xff]
        %v1032 = vld [vmem:[#allocation8 + $0x38] sm:$0xff]
        %v1033 = vld [vmem:[#allocation8 + $0x40] sm:$0xff]
        %v1034 = vld [vmem:[#allocation8 + $0x48] sm:$0xff]
        %v1035 = vld [vmem:[#allocation8 + $0x50] sm:$0xff]
        %v1036 = vld [vmem:[#allocation8 + $0x58] sm:$0xff]
        %v1037 = vld [vmem:[#allocation8 + $0x60] sm:$0xff]
        %v1038 = vld [vmem:[#allocation8 + $0x68] sm:$0xff]
        %v1039 = vld [vmem:[#allocation8 + $0x70] sm:$0xff]
        %v1040 = vld [vmem:[#allocation8 + $0x78] sm:$0xff]
        %v1041 = vld [vmem:[%s5] sm:$0x1]
        %v1043 = vlaneseq
        %v1044 = vshrl.u32 %v1043, 7
        %v1045 = vsub.s32 0, %v1044
        %v1046 = vrot.slane %v1041, %v1045
        %v1056 = vrot.slane %v1018, 7
        %vm1057 = vcmask 1041409
        %v1058 = vsel %vm1057, %v1056, %v1017
        %v1059 = vrot.slane %v1019, 6
        %vm1060 = vcmask 1042434
        %v1061 = vsel %vm1060, %v1059, %v1058
        %v1062 = vrot.slane %v1020, 5
        %vm1063 = vcmask 1043459
        %v1064 = vsel %vm1063, %v1062, %v1061
        %v1065 = vrot.slane %v1021, 4
        %vm1066 = vcmask 1044484
        %v1067 = vsel %vm1066, %v1065, %v1064
        %v1068 = vrot.slane %v1022, 3
        %vm1069 = vcmask 1045509
        %v1070 = vsel %vm1069, %v1068, %v1067
        %v1071 = vrot.slane %v1023, 2
        %vm1072 = vcmask 1046534
        %v1073 = vsel %vm1072, %v1071, %v1070
        %v1074 = vrot.slane %v1024, 1
        %vm1075 = vcmask 1047559
        %v1076 = vsel %vm1075, %v1074, %v1073
        %1078 = vmatprep.subr.mxu0 0.0
        %1079 = vmatpush1.msra.mxu0 %v1025
        %1080 = vmatprep.subr.mxu0 0.0
        %1081 = vmatpush1.msra.mxu0 %v1026
        %1082 = vmatprep.subr.mxu0 0.0
        %1083 = vmatpush1.msra.mxu0 %v1027
        %1084 = vmatprep.subr.mxu0 0.0
        %1085 = vmatpush1.msra.mxu0 %v1028
        %1086 = vmatprep.subr.mxu0 0.0
        %1087 = vmatpush1.msra.mxu0 %v1029
        %1088 = vmatprep.subr.mxu0 0.0
        %1089 = vmatpush1.msra.mxu0 %v1030
        %1090 = vmatprep.subr.mxu0 0.0
        %1091 = vmatpush1.msra.mxu0 %v1031
        %1092 = vmatprep.subr.mxu0 0.0
        %1093 = vmatpush1.msra.mxu0 %v1032
        %1094 = vmatprep.subr.mxu0 0.0
        %1095 = vmatpush1.msra.mxu0 %v1033
        %1096 = vmatprep.subr.mxu0 0.0
        %1097 = vmatpush1.msra.mxu0 %v1034
        %1098 = vmatprep.subr.mxu0 0.0
        %1099 = vmatpush1.msra.mxu0 %v1035
        %1100 = vmatprep.subr.mxu0 0.0
        %1101 = vmatpush1.msra.mxu0 %v1036
        %1102 = vmatprep.subr.mxu0 0.0
        %1103 = vmatpush1.msra.mxu0 %v1037
        %1104 = vmatprep.subr.mxu0 0.0
        %1105 = vmatpush1.msra.mxu0 %v1038
        %1106 = vmatprep.subr.mxu0 0.0
        %1107 = vmatpush1.msra.mxu0 %v1039
        %1108 = vmatprep.subr.mxu0 0.0
        %1109 = vmatpush1.msra.mxu0 %v1040
        %1110 = vmatprep.subr.mxu0 0.0
        %1111 = vmatpush1.msra.mxu0 0.0
        %1112 = vmatprep.subr.mxu0 0.0
        %1113 = vmatpush1.msra.mxu0 0.0
        %1114 = vmatprep.subr.mxu0 0.0
        %1115 = vmatpush1.msra.mxu0 0.0
        %1116 = vmatprep.subr.mxu0 0.0
        %1117 = vmatpush1.msra.mxu0 0.0
        %1118 = vmatprep.subr.mxu0 0.0
        %1119 = vmatpush1.msra.mxu0 0.0
        %1120 = vmatprep.subr.mxu0 0.0
        %1121 = vmatpush1.msra.mxu0 0.0
        %1122 = vmatprep.subr.mxu0 0.0
        %1123 = vmatpush1.msra.mxu0 0.0
        %1124 = vmatprep.subr.mxu0 0.0
        %1125 = vmatpush1.msra.mxu0 0.0
        %1126 = vmatprep.subr.mxu0 0.0
        %1127 = vmatpush1.msra.mxu0 0.0
        %1128 = vmatprep.subr.mxu0 0.0
        %1129 = vmatpush1.msra.mxu0 0.0
        %1130 = vmatprep.subr.mxu0 0.0
        %1131 = vmatpush1.msra.mxu0 0.0
        %1132 = vmatprep.subr.mxu0 0.0
        %1133 = vmatpush1.msra.mxu0 0.0
        %1134 = vmatprep.subr.mxu0 0.0
        %1135 = vmatpush1.msra.mxu0 0.0
        %1136 = vmatprep.subr.mxu0 0.0
        %1137 = vmatpush1.msra.mxu0 0.0
        %1138 = vmatprep.subr.mxu0 0.0
        %1139 = vmatpush1.msra.mxu0 0.0
        %1140 = vmatprep.subr.mxu0 0.0
        %1141 = vmatpush1.msra.mxu0 0.0
        %1142 = vmatprep.mubr.f32.mxu0 0.0
        %1143 = vmatmul.mubr.f32.gmra.mrb[0].mxu0 %v1076
        %v1144 = vpop.f32.mrb[0].mxu0
        %v1145 = vadd.f32 %v1046, %v1144
        %v1146 = vpop.f32.mrb[0].mxu0
        %1147 = vdwg.mxu0
        %vm1148 = vcmp.ge.f32.partialorder %v1145, 0.0
        %v1149 = vmul.f32 %v1145, 0.01
        %v1150 = vsel %vm1148, %v1145, %v1149
        %v1151 = vld [vmem:[#allocation10] sm:$0xff]
        %v1152 = vld [vmem:[#allocation10 + $0x8] sm:$0xff]
        %v1153 = vld [vmem:[#allocation10 + $0x10] sm:$0xff]
        %v1154 = vld [vmem:[#allocation10 + $0x18] sm:$0xff]
        %v1155 = vld [vmem:[#allocation10 + $0x20] sm:$0xff]
        %v1156 = vld [vmem:[#allocation10 + $0x28] sm:$0xff]
        %v1157 = vld [vmem:[#allocation10 + $0x30] sm:$0xff]
        %v1158 = vld [vmem:[#allocation10 + $0x38] sm:$0xff]
        %v1159 = vld [vmem:[#allocation10 + $0x40] sm:$0xff]
        %v1160 = vld [vmem:[#allocation10 + $0x48] sm:$0xff]
        %v1161 = vld [vmem:[#allocation10 + $0x50] sm:$0xff]
        %v1162 = vld [vmem:[#allocation10 + $0x58] sm:$0xff]
        %v1163 = vld [vmem:[#allocation10 + $0x60] sm:$0xff]
        %v1164 = vld [vmem:[#allocation10 + $0x68] sm:$0xff]
        %v1165 = vld [vmem:[#allocation10 + $0x70] sm:$0xff]
        %v1166 = vld [vmem:[#allocation10 + $0x78] sm:$0xff]
        %v1167 = vld [vmem:[%s7] sm:$0x1]
        %v1169 = vlaneseq
        %v1170 = vshrl.u32 %v1169, 7
        %v1171 = vsub.s32 0, %v1170
        %v1172 = vrot.slane %v1167, %v1171
        %1174 = vmatprep.subr.mxu0 0.0
        %1175 = vmatpush1.msra.mxu0 %v1151
        %1176 = vmatprep.subr.mxu0 0.0
        %1177 = vmatpush1.msra.mxu0 %v1152
        %1178 = vmatprep.subr.mxu0 0.0
        %1179 = vmatpush1.msra.mxu0 %v1153
        %1180 = vmatprep.subr.mxu0 0.0
        %1181 = vmatpush1.msra.mxu0 %v1154
        %1182 = vmatprep.subr.mxu0 0.0
        %1183 = vmatpush1.msra.mxu0 %v1155
        %1184 = vmatprep.subr.mxu0 0.0
        %1185 = vmatpush1.msra.mxu0 %v1156
        %1186 = vmatprep.subr.mxu0 0.0
        %1187 = vmatpush1.msra.mxu0 %v1157
        %1188 = vmatprep.subr.mxu0 0.0
        %1189 = vmatpush1.msra.mxu0 %v1158
        %1190 = vmatprep.subr.mxu0 0.0
        %1191 = vmatpush1.msra.mxu0 %v1159
        %1192 = vmatprep.subr.mxu0 0.0
        %1193 = vmatpush1.msra.mxu0 %v1160
        %1194 = vmatprep.subr.mxu0 0.0
        %1195 = vmatpush1.msra.mxu0 %v1161
        %1196 = vmatprep.subr.mxu0 0.0
        %1197 = vmatpush1.msra.mxu0 %v1162
        %1198 = vmatprep.subr.mxu0 0.0
        %1199 = vmatpush1.msra.mxu0 %v1163
        %1200 = vmatprep.subr.mxu0 0.0
        %1201 = vmatpush1.msra.mxu0 %v1164
        %1202 = vmatprep.subr.mxu0 0.0
        %1203 = vmatpush1.msra.mxu0 %v1165
        %1204 = vmatprep.subr.mxu0 0.0
        %1205 = vmatpush1.msra.mxu0 %v1166
        %1206 = vmatprep.subr.mxu0 0.0
        %1207 = vmatpush1.msra.mxu0 0.0
        %1208 = vmatprep.subr.mxu0 0.0
        %1209 = vmatpush1.msra.mxu0 0.0
        %1210 = vmatprep.subr.mxu0 0.0
        %1211 = vmatpush1.msra.mxu0 0.0
        %1212 = vmatprep.subr.mxu0 0.0
        %1213 = vmatpush1.msra.mxu0 0.0
        %1214 = vmatprep.subr.mxu0 0.0
        %1215 = vmatpush1.msra.mxu0 0.0
        %1216 = vmatprep.subr.mxu0 0.0
        %1217 = vmatpush1.msra.mxu0 0.0
        %1218 = vmatprep.subr.mxu0 0.0
        %1219 = vmatpush1.msra.mxu0 0.0
        %1220 = vmatprep.subr.mxu0 0.0
        %1221 = vmatpush1.msra.mxu0 0.0
        %1222 = vmatprep.subr.mxu0 0.0
        %1223 = vmatpush1.msra.mxu0 0.0
        %1224 = vmatprep.subr.mxu0 0.0
        %1225 = vmatpush1.msra.mxu0 0.0
        %1226 = vmatprep.subr.mxu0 0.0
        %1227 = vmatpush1.msra.mxu0 0.0
        %1228 = vmatprep.subr.mxu0 0.0
        %1229 = vmatpush1.msra.mxu0 0.0
        %1230 = vmatprep.subr.mxu0 0.0
        %1231 = vmatpush1.msra.mxu0 0.0
        %1232 = vmatprep.subr.mxu0 0.0
        %1233 = vmatpush1.msra.mxu0 0.0
        %1234 = vmatprep.subr.mxu0 0.0
        %1235 = vmatpush1.msra.mxu0 0.0
        %1236 = vmatprep.subr.mxu0 0.0
        %1237 = vmatpush1.msra.mxu0 0.0
        %1238 = vmatprep.mubr.f32.mxu0 0.0
        %1239 = vmatmul.mubr.f32.gmra.mrb[0].mxu0 %v1150
        %v1240 = vpop.f32.mrb[0].mxu0
        %v1241 = vadd.f32 %v1172, %v1240
        %v1242 = vpop.f32.mrb[0].mxu0
        %1243 = vdwg.mxu0
        %vm1244 = vcmp.ge.f32.partialorder %v1241, 0.0
        %v1245 = vmul.f32 %v1241, 0.01
        %v1246 = vsel %vm1244, %v1241, %v1245
        %1247 = vst [vmem:[%s382] sm:$0xff] %v1246
        %s1248 = sand.u32 %s208, 1
        %s1249 = scalar_lea.sflag [#allocation4], %s1248
        %s1250 = sand.u32 %s208, 1
        %s1251 = smul.addr %s1250, 8
        %s1252 = scalar_lea.vmem [#allocation11], %s1251
        // Predicated region
        $region73: #{tpu_custom_call.1} parent=51 // pred_check
          %p1253 = pneg %p218
        $region74: #{tpu_custom_call.1} parent=51 // pred_check_branch
          %1255 = sbr.rel (%p1253) target = $region76
        $region75: #{tpu_custom_call.1} parent=51 // pred_region
          %s1257 = ssub.s32 128, 128
          %1258 = vsyncadd %s1249, %s1257
          %s1259 = smul.addr %s27, 128
          %s1260 = scalar_lea.hbm %s8, %s1259
          %s1262 = sshll.u32 %s1252, 4
          %s1263 = int_to_ptr.vmem [resolvable:$true] %s1262
          %1265 = dma.vmem_to_hbm [thread:$0]  %s1263, 128, %s1260, %s1249
        $region76: #{tpu_custom_call.1} parent=51 // pred_fallthru
          _
      $region52: #{tpu_custom_call.1} parent=5 // pred_fallthru
        _
      %p1266 = scmp.le.s32.totalorder 2, %s22
      // Predicated region
      $region77: #{tpu_custom_call.1} parent=5 // pred_check
        %p1267 = pneg %p1266
      $region78: #{tpu_custom_call.1} parent=5 // pred_check_branch
        %1269 = sbr.rel (%p1267) target = $region80
      $region79: #{tpu_custom_call.1} parent=5 // pred_region
        %s1270 = ssub.s32 %s22, 2
        // Predicated region
        $region81: #{tpu_custom_call.1} parent=79 // pred_check
          %p1271 = pneg %p224
        $region82: #{tpu_custom_call.1} parent=79 // pred_check_branch
          %1273 = sbr.rel (%p1271) target = $region84
        $region83: #{tpu_custom_call.1} parent=79 // pred_region
          %s1274 = sand.u32 %s209, 1
          %s1275 = scalar_lea.sflag [#allocation4], %s1274
          %s1276 = sand.u32 %s209, 1
          %s1277 = smul.addr %s1276, 8
          %s1278 = scalar_lea.vmem [#allocation11], %s1277
          %1279 = dma.done %s1275, 128
        $region84: #{tpu_custom_call.1} parent=79 // pred_fallthru
          _
      $region80: #{tpu_custom_call.1} parent=5 // pred_fallthru
        _
    $region6: #{tpu_custom_call.1} parent=1 // loop_footer
      %s26 = sadd.s32 1, %s22
    $region7: #{tpu_custom_call.1} parent=1 // loop_footer_branch
      %21 = sbr.rel target = $region3
    $region8: #{tpu_custom_call.1} parent=1 // loop_exit
      _
    %1280 = vsyncpa [#allocation3], 1
    %s1281 = scalar_lea.sflag [#allocation3], 1
    %1282 = vsyncpa %s1281, 1
    %1283 = vsyncpa [#allocation6], 1
    %1284 = vsyncpa [#allocation9], 1
    %1285 = vsyncpa [#allocation4], 1
    %s1286 = scalar_lea.sflag [#allocation4], 1
    %1287 = vsyncpa %s1286, 1

</llo_original>
